<compile_context>
chip_gen: v5e
topology: v5e:2x2
jax: 0.10.0
libtpu: 0.0.40
codegen_flags: <defaults>
</compile_context>

<pallas_src>
import functools

import jax
import jax.numpy as jnp
import numpy as np
from jax.experimental import pallas as pl
from jax.experimental.pallas import tpu as pltpu


def _r2_kernel(yt_ref, yp_ref, state_ref, new_state_ref, r2_ref,
               ts_ref, tss_ref, prod_ref, pss_ref,
               *, n_rows, total_count, fold, targets, sub, need_mask):
    k = pl.program_id(0)
    last = pl.num_programs(0) - 1

    @pl.when(k == 0)
    def _init():
        ts_ref[...] = jnp.zeros_like(ts_ref)
        tss_ref[...] = jnp.zeros_like(tss_ref)
        prod_ref[...] = jnp.zeros_like(prod_ref)
        pss_ref[...] = jnp.zeros_like(pss_ref)

    yt = yt_ref[...].astype(jnp.float32)          # [tile_rows, lanes]
    yp = yp_ref[...].astype(jnp.float32)
    tile_rows, lanes = yt.shape

    def accumulate(yt_v, yp_v):
        if sub > 1:
            # Group rows into (groups, sub, lanes): the axis-0 reduce is pure
            # VPU vreg adds; the cross-sublane XLU reduce is deferred to
            # finalize (runs once instead of once per tile).
            g = tile_rows // sub
            yt3 = yt_v.reshape(g, sub, lanes)
            yp3 = yp_v.reshape(g, sub, lanes)
            ts_ref[...] += jnp.sum(yt3, axis=0)
            tss_ref[...] += jnp.sum(yt3 * yt3, axis=0)
            prod_ref[...] += jnp.sum(yt3 * yp3, axis=0)
            pss_ref[...] += jnp.sum(yp3 * yp3, axis=0)
        else:
            ts_ref[...] += jnp.sum(yt_v, axis=0, keepdims=True)
            tss_ref[...] += jnp.sum(yt_v * yt_v, axis=0, keepdims=True)
            prod_ref[...] += jnp.sum(yt_v * yp_v, axis=0, keepdims=True)
            pss_ref[...] += jnp.sum(yp_v * yp_v, axis=0, keepdims=True)

    if need_mask:
        # Only the (single, possibly partial) last tile pays the mask cost.
        @pl.when(k != last)
        def _full_tile():
            accumulate(yt, yp)

        @pl.when(k == last)
        def _masked_tile():
            row = (jax.lax.broadcasted_iota(jnp.int32, (tile_rows, lanes), 0)
                   + k * tile_rows)
            valid = row < n_rows
            accumulate(jnp.where(valid, yt, 0.0), jnp.where(valid, yp, 0.0))
    else:
        accumulate(yt, yp)

    @pl.when(k == last)
    def _finalize():
        t = targets

        def fold_lanes(acc):                       # [sub, lanes] -> [1, T]
            s = jnp.sum(acc, axis=0, keepdims=True)        # XLU, once
            out = s[:, 0:t]
            for f in range(1, fold):                       # lane-group fold
                out = out + s[:, f * t:(f + 1) * t]
            return out

        upd = jnp.concatenate(
            [jnp.full((1, t), float(total_count), jnp.float32),  # count = N
             fold_lanes(ts_ref[...]),
             fold_lanes(tss_ref[...]),
             fold_lanes(prod_ref[...]),
             fold_lanes(pss_ref[...])],
            axis=0)                                # [5, T]

        new_state = state_ref[...] + upd
        new_state_ref[...] = new_state             # single full [5, T] store

        new_count      = new_state[0:1, :]
        new_true_sum   = new_state[1:2, :]
        new_true_sumsq = new_state[2:3, :]
        new_product    = new_state[3:4, :]
        new_pred_sumsq = new_state[4:5, :]

        true_mean = new_true_sum / new_count
        total = new_true_sumsq - new_count * true_mean * true_mean
        resid = new_pred_sumsq - 2.0 * new_product + new_true_sumsq
        # Matches the PyTorch module exactly: zero-variance targets give
        # inf/nan just like the reference.
        r2_ref[...] = 1.0 - resid / total          # [1, T]


def _vmem_plan():
    """(working_budget_bytes, vmem_limit_bytes), generation aware."""
    try:
        cap = int(pltpu.get_tpu_info().vmem_capacity_bytes)
    except Exception:
        cap = 128 * 1024 * 1024
    if cap >= 100 * 1024 * 1024:          # v5e / v6e: 128 MiB physical VMEM
        return 36 * 1024 * 1024, 64 * 1024 * 1024
    # v7x-class: 64 MiB physical VMEM -> keep headroom.
    return 24 * 1024 * 1024, 48 * 1024 * 1024


def _sublane_multiple(itemsize):
    # Native sublane tile: f32 -> 8, bf16 -> 16, int8/fp8 -> 32.
    return max(8, 32 // itemsize)


def _pick_tile_rows(n_rows, lanes, itemsize, budget):
    lane_pad = ((lanes + 127) // 128) * 128
    # 2 inputs x 2 pipeline buffers at input dtype + ~4 full-tile f32 temps.
    row_bytes = 4 * lane_pad * itemsize + 4 * lane_pad * 4
    mult = _sublane_multiple(itemsize)
    tile = budget // row_bytes
    tile = max(mult, (tile // mult) * mult)
    tile = min(tile, 16384)
    return n_rows if tile >= n_rows else int(tile)


def r2_forward(y_true, y_pred, state, summarize=True, tile_n=None):
    """One forward pass of the R2 module.

    Args:
      y_true, y_pred: [N, num_targets] arrays (any float dtype).
      state: [5, num_targets] f32 running buffers
             (count, true_sum, true_sumsq, product, pred_sumsq).
      tile_n: optional batch tile size, counted in (possibly lane-folded) rows.
    Returns:
      (r2, new_state) where r2 is a scalar if summarize else [num_targets].
    """
    n, t = y_true.shape
    assert y_pred.shape == (n, t) and state.shape[-2:] == (5, t)
    state = state.astype(jnp.float32)

    # --- Lane folding: [N, T] -> [N//F, F*T] when T < 128 divides 128. -----
    fold = 1
    if t < 128 and 128 % t == 0:
        f = 128 // t
        if n % f == 0:
            fold = f
    n_rows = n // fold
    lanes = t * fold
    yt_in = y_true.reshape(n_rows, lanes) if fold > 1 else y_true
    yp_in = y_pred.reshape(n_rows, lanes) if fold > 1 else y_pred

    itemsize = jnp.dtype(y_true.dtype).itemsize
    budget, vmem_limit = _vmem_plan()
    mult = _sublane_multiple(itemsize)

    if tile_n is None:
        tile = _pick_tile_rows(n_rows, lanes, itemsize, budget)
    else:
        tile = min(int(tile_n), n_rows)
        if tile < n_rows and tile % mult != 0:
            tile = max(mult, (tile // mult) * mult)

    grid = (pl.cdiv(n_rows, tile),)
    need_mask = (n_rows % tile) != 0
    sub = 8 if tile % 8 == 0 else 1

    kernel = functools.partial(
        _r2_kernel, n_rows=n_rows, total_count=n, fold=fold, targets=t,
        sub=sub, need_mask=need_mask)

    cost = pl.CostEstimate(
        flops=8 * n * t,
        transcendentals=0,
        bytes_accessed=2 * n * t * itemsize + 11 * t * 4)

    new_state, r2 = pl.pallas_call(
        kernel,
        out_shape=(
            jax.ShapeDtypeStruct((5, t), jnp.float32),
            jax.ShapeDtypeStruct((1, t), jnp.float32),
        ),
        grid=grid,
        in_specs=[
            pl.BlockSpec((tile, lanes), lambda k: (k, 0)),
            pl.BlockSpec((tile, lanes), lambda k: (k, 0)),
            pl.BlockSpec((5, t), lambda k: (0, 0)),          # resident state
        ],
        out_specs=(
            pl.BlockSpec((5, t), lambda k: (0, 0)),          # resident output
            pl.BlockSpec((1, t), lambda k: (0, 0)),
        ),
        scratch_shapes=[pltpu.VMEM((sub, lanes), jnp.float32)] * 4,
        input_output_aliases={2: 0},                         # state -> new_state
        compiler_params=pltpu.CompilerParams(
            dimension_semantics=("arbitrary",),              # batch reduction
            vmem_limit_bytes=vmem_limit,
        ),
        cost_estimate=cost,
    )(yt_in, yp_in, state)

    r2_vec = r2[0]
    if summarize:
        return jnp.mean(r2_vec), new_state
    return r2_vec, new_state


def r2_init_state(num_targets):
    # All registered buffers start at zero (deterministic, no checkpoint).
    return jnp.zeros((5, num_targets), jnp.float32)


def _r2_reference(y_true, y_pred, state):
    """Plain-JAX reference identical to the PyTorch module."""
    yt = y_true.astype(jnp.float32)
    yp = y_pred.astype(jnp.float32)
    upd = jnp.stack(
        [
            jnp.full((yt.shape[1],), yt.shape[0], jnp.float32),
            jnp.sum(yt, axis=0),
            jnp.sum(yt * yt, axis=0),
            jnp.sum(yt * yp, axis=0),
            jnp.sum(yp * yp, axis=0),
        ],
        axis=0,
    )
    ns = state + upd
    cnt, ts, tss, prod, pss = ns[0], ns[1], ns[2], ns[3], ns[4]
    mean = ts / cnt
    total = tss - cnt * mean * mean
    resid = pss - 2.0 * prod + tss
    return 1.0 - resid / total, ns


if __name__ == "__main__":
    key = jax.random.PRNGKey(0)
    k1, k2, k3, k4, k5, k6 = jax.random.split(key, 6)

    # --- Test 1: lane-folded (T=32 -> 128 lanes), single tile, summarize. ---
    t1, n1 = 32, 8
    yt1 = jax.random.normal(k1, (n1, t1), dtype=jnp.float32)
    yp1 = yt1 + 0.1 * jax.random.normal(k2, (n1, t1), dtype=jnp.float32)
    r2_mean, state1 = r2_forward(yt1, yp1, r2_init_state(t1), summarize=True)
    jax.block_until_ready((r2_mean, state1))
    r2_ref1, st_ref1 = _r2_reference(yt1, yp1, r2_init_state(t1))
    np.testing.assert_allclose(np.asarray(r2_mean),
                               float(np.mean(np.asarray(r2_ref1))),
                               rtol=1e-5, atol=1e-5)
    np.testing.assert_allclose(np.asarray(state1), np.asarray(st_ref1),
                               rtol=1e-5, atol=1e-5)

    # --- Test 2: folded + multi-tile + masked partial tile, running state. --
    n2 = 200
    yt2 = jax.random.normal(k3, (n2, t1), dtype=jnp.float32)
    yp2 = yt2 + 0.25 * jax.random.normal(k4, (n2, t1), dtype=jnp.float32)
    r2_ref2, st_ref2 = _r2_reference(yt2, yp2, st_ref1)
    r2_vec2, state2 = r2_forward(yt2, yp2, state1, summarize=False, tile_n=16)
    jax.block_until_ready((r2_vec2, state2))
    np.testing.assert_allclose(np.asarray(r2_vec2), np.asarray(r2_ref2),
                               rtol=1e-5, atol=1e-5)
    np.testing.assert_allclose(np.asarray(state2), np.asarray(st_ref2),
                               rtol=1e-5, atol=1e-5)

    # --- Test 3: unfolded path (T=128), multi-tile + masked partial tile. ---
    t3, n3 = 128, 40
    yt3 = jax.random.normal(k5, (n3, t3), dtype=jnp.float32)
    yp3 = yt3 + 0.5 * jax.random.normal(k6, (n3, t3), dtype=jnp.float32)
    r2_ref3, st_ref3 = _r2_reference(yt3, yp3, r2_init_state(t3))
    r2_vec3, state3 = r2_forward(yt3, yp3, r2_init_state(t3),
                                 summarize=False, tile_n=16)
    jax.block_until_ready((r2_vec3, state3))
    np.testing.assert_allclose(np.asarray(r2_vec3), np.asarray(r2_ref3),
                               rtol=1e-5, atol=1e-5)
    np.testing.assert_allclose(np.asarray(state3), np.asarray(st_ref3),
                               rtol=1e-5, atol=1e-5)

    print("KERNEL_OK")
</pallas_src>

<mosaic_0001>
module attributes {stable_mosaic.version = 11 : i64} {
  func.func @_r2_kernel(%arg0: i32, %arg1: memref<2x128xf32, #tpu.memory_space<vmem>>, %arg2: memref<2x128xf32, #tpu.memory_space<vmem>>, %arg3: memref<5x32xf32, #tpu.memory_space<vmem>>, %arg4: memref<5x32xf32, #tpu.memory_space<vmem>>, %arg5: memref<1x32xf32, #tpu.memory_space<vmem>>, %arg6: memref<1x128xf32, #tpu.memory_space<vmem>>, %arg7: memref<1x128xf32, #tpu.memory_space<vmem>>, %arg8: memref<1x128xf32, #tpu.memory_space<vmem>>, %arg9: memref<1x128xf32, #tpu.memory_space<vmem>>) attributes {dimension_semantics = [#tpu.dimension_semantics<arbitrary>], iteration_bounds = array<i64: 1>, scalar_prefetch = 0 : i64, scratch_operands = 4 : i64, tpu.core_type = #tpu.core_type<tc>, window_params = [{transform_indices = @transform_0, window_bounds = array<i64: 2, 128>}, {transform_indices = @transform_1, window_bounds = array<i64: 2, 128>}, {pipeline_mode = #tpu.pipeline_mode<synchronous>, transform_indices = @transform_2, window_bounds = array<i64: 5, 32>}, {pipeline_mode = #tpu.pipeline_mode<synchronous>, transform_indices = @transform_3, window_bounds = array<i64: 5, 32>}, {pipeline_mode = #tpu.pipeline_mode<synchronous>, transform_indices = @transform_4, window_bounds = array<i64: 1, 32>}]} {
    %c0_i32 = arith.constant 0 : i32
    %0 = arith.cmpi eq, %arg0, %c0_i32 : i32
    %1 = arith.extui %0 : i1 to i32
    %c0_i32_0 = arith.constant 0 : i32
    %2 = arith.cmpi ne, %1, %c0_i32_0 : i32
    scf.if %2 {
      %cst_25 = arith.constant 0.000000e+00 : f32
      %31 = vector.broadcast %cst_25 : f32 to vector<1x128xf32>
      %c0_26 = arith.constant 0 : index
      %c0_27 = arith.constant 0 : index
      %32 = vector.load %arg6[%c0_26, %c0_27] : memref<1x128xf32, #tpu.memory_space<vmem>>, vector<1x128xf32>
      tpu.vector_store %arg6[%c0_26, %c0_27], %31 {strides = array<i32>} : memref<1x128xf32, #tpu.memory_space<vmem>>, vector<1x128xf32>,
      %cst_28 = arith.constant 0.000000e+00 : f32
      %33 = vector.broadcast %cst_28 : f32 to vector<1x128xf32>
      %c0_29 = arith.constant 0 : index
      %c0_30 = arith.constant 0 : index
      %34 = vector.load %arg7[%c0_29, %c0_30] : memref<1x128xf32, #tpu.memory_space<vmem>>, vector<1x128xf32>
      tpu.vector_store %arg7[%c0_29, %c0_30], %33 {strides = array<i32>} : memref<1x128xf32, #tpu.memory_space<vmem>>, vector<1x128xf32>,
      %cst_31 = arith.constant 0.000000e+00 : f32
      %35 = vector.broadcast %cst_31 : f32 to vector<1x128xf32>
      %c0_32 = arith.constant 0 : index
      %c0_33 = arith.constant 0 : index
      %36 = vector.load %arg8[%c0_32, %c0_33] : memref<1x128xf32, #tpu.memory_space<vmem>>, vector<1x128xf32>
      tpu.vector_store %arg8[%c0_32, %c0_33], %35 {strides = array<i32>} : memref<1x128xf32, #tpu.memory_space<vmem>>, vector<1x128xf32>,
      %cst_34 = arith.constant 0.000000e+00 : f32
      %37 = vector.broadcast %cst_34 : f32 to vector<1x128xf32>
      %c0_35 = arith.constant 0 : index
      %c0_36 = arith.constant 0 : index
      %38 = vector.load %arg9[%c0_35, %c0_36] : memref<1x128xf32, #tpu.memory_space<vmem>>, vector<1x128xf32>
      tpu.vector_store %arg9[%c0_35, %c0_36], %37 {strides = array<i32>} : memref<1x128xf32, #tpu.memory_space<vmem>>, vector<1x128xf32>,
    } else {
    }
    %c0 = arith.constant 0 : index
    %c0_1 = arith.constant 0 : index
    %3 = vector.load %arg1[%c0, %c0_1] : memref<2x128xf32, #tpu.memory_space<vmem>>, vector<2x128xf32>
    %c0_2 = arith.constant 0 : index
    %c0_3 = arith.constant 0 : index
    %4 = vector.load %arg2[%c0_2, %c0_3] : memref<2x128xf32, #tpu.memory_space<vmem>>, vector<2x128xf32>
    %c0_4 = arith.constant 0 : index
    %c0_5 = arith.constant 0 : index
    %5 = vector.load %arg6[%c0_4, %c0_5] : memref<1x128xf32, #tpu.memory_space<vmem>>, vector<1x128xf32>
    %cst = arith.constant dense<0.000000e+00> : vector<128xf32>
    %6 = vector.multi_reduction <add>, %3, %cst [0] : vector<2x128xf32> to vector<128xf32>
    %7 = vector.shape_cast %6 : vector<128xf32> to vector<1x128xf32>
    %8 = arith.addf %5, %7 : vector<1x128xf32>
    %c0_6 = arith.constant 0 : index
    %c0_7 = arith.constant 0 : index
    %9 = vector.load %arg6[%c0_6, %c0_7] : memref<1x128xf32, #tpu.memory_space<vmem>>, vector<1x128xf32>
    tpu.vector_store %arg6[%c0_6, %c0_7], %8 {strides = array<i32>} : memref<1x128xf32, #tpu.memory_space<vmem>>, vector<1x128xf32>,
    %c0_8 = arith.constant 0 : index
    %c0_9 = arith.constant 0 : index
    %10 = vector.load %arg7[%c0_8, %c0_9] : memref<1x128xf32, #tpu.memory_space<vmem>>, vector<1x128xf32>
    %11 = arith.mulf %3, %3 : vector<2x128xf32>
    %cst_10 = arith.constant dense<0.000000e+00> : vector<128xf32>
    %12 = vector.multi_reduction <add>, %11, %cst_10 [0] : vector<2x128xf32> to vector<128xf32>
    %13 = vector.shape_cast %12 : vector<128xf32> to vector<1x128xf32>
    %14 = arith.addf %10, %13 : vector<1x128xf32>
    %c0_11 = arith.constant 0 : index
    %c0_12 = arith.constant 0 : index
    %15 = vector.load %arg7[%c0_11, %c0_12] : memref<1x128xf32, #tpu.memory_space<vmem>>, vector<1x128xf32>
    tpu.vector_store %arg7[%c0_11, %c0_12], %14 {strides = array<i32>} : memref<1x128xf32, #tpu.memory_space<vmem>>, vector<1x128xf32>,
    %c0_13 = arith.constant 0 : index
    %c0_14 = arith.constant 0 : index
    %16 = vector.load %arg8[%c0_13, %c0_14] : memref<1x128xf32, #tpu.memory_space<vmem>>, vector<1x128xf32>
    %17 = arith.mulf %3, %4 : vector<2x128xf32>
    %cst_15 = arith.constant dense<0.000000e+00> : vector<128xf32>
    %18 = vector.multi_reduction <add>, %17, %cst_15 [0] : vector<2x128xf32> to vector<128xf32>
    %19 = vector.shape_cast %18 : vector<128xf32> to vector<1x128xf32>
    %20 = arith.addf %16, %19 : vector<1x128xf32>
    %c0_16 = arith.constant 0 : index
    %c0_17 = arith.constant 0 : index
    %21 = vector.load %arg8[%c0_16, %c0_17] : memref<1x128xf32, #tpu.memory_space<vmem>>, vector<1x128xf32>
    tpu.vector_store %arg8[%c0_16, %c0_17], %20 {strides = array<i32>} : memref<1x128xf32, #tpu.memory_space<vmem>>, vector<1x128xf32>,
    %c0_18 = arith.constant 0 : index
    %c0_19 = arith.constant 0 : index
    %22 = vector.load %arg9[%c0_18, %c0_19] : memref<1x128xf32, #tpu.memory_space<vmem>>, vector<1x128xf32>
    %23 = arith.mulf %4, %4 : vector<2x128xf32>
    %cst_20 = arith.constant dense<0.000000e+00> : vector<128xf32>
    %24 = vector.multi_reduction <add>, %23, %cst_20 [0] : vector<2x128xf32> to vector<128xf32>
    %25 = vector.shape_cast %24 : vector<128xf32> to vector<1x128xf32>
    %26 = arith.addf %22, %25 : vector<1x128xf32>
    %c0_21 = arith.constant 0 : index
    %c0_22 = arith.constant 0 : index
    %27 = vector.load %arg9[%c0_21, %c0_22] : memref<1x128xf32, #tpu.memory_space<vmem>>, vector<1x128xf32>
    tpu.vector_store %arg9[%c0_21, %c0_22], %26 {strides = array<i32>} : memref<1x128xf32, #tpu.memory_space<vmem>>, vector<1x128xf32>,
    %c0_i32_23 = arith.constant 0 : i32
    %28 = arith.cmpi eq, %arg0, %c0_i32_23 : i32
    %29 = arith.extui %28 : i1 to i32
    %c0_i32_24 = arith.constant 0 : i32
    %30 = arith.cmpi ne, %29, %c0_i32_24 : i32
    scf.if %30 {
      %cst_25 = arith.constant 8.000000e+00 : f32
      %31 = vector.broadcast %cst_25 : f32 to vector<1x32xf32>
      %c0_26 = arith.constant 0 : index
      %c0_27 = arith.constant 0 : index
      %32 = vector.load %arg6[%c0_26, %c0_27] : memref<1x128xf32, #tpu.memory_space<vmem>>, vector<1x128xf32>
      %cst_28 = arith.constant dense<0.000000e+00> : vector<128xf32>
      %33 = vector.multi_reduction <add>, %32, %cst_28 [0] : vector<1x128xf32> to vector<128xf32>
      %34 = vector.shape_cast %33 : vector<128xf32> to vector<1x128xf32>
      %35 = vector.extract_strided_slice %34 {offsets = [0, 0], sizes = [1, 32], strides = [1, 1]} : vector<1x128xf32> to vector<1x32xf32>
      %36 = vector.extract_strided_slice %34 {offsets = [0, 32], sizes = [1, 32], strides = [1, 1]} : vector<1x128xf32> to vector<1x32xf32>
      %37 = arith.addf %35, %36 : vector<1x32xf32>
      %38 = vector.extract_strided_slice %34 {offsets = [0, 64], sizes = [1, 32], strides = [1, 1]} : vector<1x128xf32> to vector<1x32xf32>
      %39 = arith.addf %37, %38 : vector<1x32xf32>
      %40 = vector.extract_strided_slice %34 {offsets = [0, 96], sizes = [1, 32], strides = [1, 1]} : vector<1x128xf32> to vector<1x32xf32>
      %41 = arith.addf %39, %40 : vector<1x32xf32>
      %c0_29 = arith.constant 0 : index
      %c0_30 = arith.constant 0 : index
      %42 = vector.load %arg7[%c0_29, %c0_30] : memref<1x128xf32, #tpu.memory_space<vmem>>, vector<1x128xf32>
      %cst_31 = arith.constant dense<0.000000e+00> : vector<128xf32>
      %43 = vector.multi_reduction <add>, %42, %cst_31 [0] : vector<1x128xf32> to vector<128xf32>
      %44 = vector.shape_cast %43 : vector<128xf32> to vector<1x128xf32>
      %45 = vector.extract_strided_slice %44 {offsets = [0, 0], sizes = [1, 32], strides = [1, 1]} : vector<1x128xf32> to vector<1x32xf32>
      %46 = vector.extract_strided_slice %44 {offsets = [0, 32], sizes = [1, 32], strides = [1, 1]} : vector<1x128xf32> to vector<1x32xf32>
      %47 = arith.addf %45, %46 : vector<1x32xf32>
      %48 = vector.extract_strided_slice %44 {offsets = [0, 64], sizes = [1, 32], strides = [1, 1]} : vector<1x128xf32> to vector<1x32xf32>
      %49 = arith.addf %47, %48 : vector<1x32xf32>
      %50 = vector.extract_strided_slice %44 {offsets = [0, 96], sizes = [1, 32], strides = [1, 1]} : vector<1x128xf32> to vector<1x32xf32>
      %51 = arith.addf %49, %50 : vector<1x32xf32>
      %c0_32 = arith.constant 0 : index
      %c0_33 = arith.constant 0 : index
      %52 = vector.load %arg8[%c0_32, %c0_33] : memref<1x128xf32, #tpu.memory_space<vmem>>, vector<1x128xf32>
      %cst_34 = arith.constant dense<0.000000e+00> : vector<128xf32>
      %53 = vector.multi_reduction <add>, %52, %cst_34 [0] : vector<1x128xf32> to vector<128xf32>
      %54 = vector.shape_cast %53 : vector<128xf32> to vector<1x128xf32>
      %55 = vector.extract_strided_slice %54 {offsets = [0, 0], sizes = [1, 32], strides = [1, 1]} : vector<1x128xf32> to vector<1x32xf32>
      %56 = vector.extract_strided_slice %54 {offsets = [0, 32], sizes = [1, 32], strides = [1, 1]} : vector<1x128xf32> to vector<1x32xf32>
      %57 = arith.addf %55, %56 : vector<1x32xf32>
      %58 = vector.extract_strided_slice %54 {offsets = [0, 64], sizes = [1, 32], strides = [1, 1]} : vector<1x128xf32> to vector<1x32xf32>
      %59 = arith.addf %57, %58 : vector<1x32xf32>
      %60 = vector.extract_strided_slice %54 {offsets = [0, 96], sizes = [1, 32], strides = [1, 1]} : vector<1x128xf32> to vector<1x32xf32>
      %61 = arith.addf %59, %60 : vector<1x32xf32>
      %c0_35 = arith.constant 0 : index
      %c0_36 = arith.constant 0 : index
      %62 = vector.load %arg9[%c0_35, %c0_36] : memref<1x128xf32, #tpu.memory_space<vmem>>, vector<1x128xf32>
      %cst_37 = arith.constant dense<0.000000e+00> : vector<128xf32>
      %63 = vector.multi_reduction <add>, %62, %cst_37 [0] : vector<1x128xf32> to vector<128xf32>
      %64 = vector.shape_cast %63 : vector<128xf32> to vector<1x128xf32>
      %65 = vector.extract_strided_slice %64 {offsets = [0, 0], sizes = [1, 32], strides = [1, 1]} : vector<1x128xf32> to vector<1x32xf32>
      %66 = vector.extract_strided_slice %64 {offsets = [0, 32], sizes = [1, 32], strides = [1, 1]} : vector<1x128xf32> to vector<1x32xf32>
      %67 = arith.addf %65, %66 : vector<1x32xf32>
      %68 = vector.extract_strided_slice %64 {offsets = [0, 64], sizes = [1, 32], strides = [1, 1]} : vector<1x128xf32> to vector<1x32xf32>
      %69 = arith.addf %67, %68 : vector<1x32xf32>
      %70 = vector.extract_strided_slice %64 {offsets = [0, 96], sizes = [1, 32], strides = [1, 1]} : vector<1x128xf32> to vector<1x32xf32>
      %71 = arith.addf %69, %70 : vector<1x32xf32>
      %72 = tpu.concatenate %31, %41, %51, %61, %71 in 0 : vector<1x32xf32>, vector<1x32xf32>, vector<1x32xf32>, vector<1x32xf32>, vector<1x32xf32> -> vector<5x32xf32>
      %c0_38 = arith.constant 0 : index
      %c0_39 = arith.constant 0 : index
      %73 = vector.load %arg3[%c0_38, %c0_39] : memref<5x32xf32, #tpu.memory_space<vmem>>, vector<5x32xf32>
      %74 = arith.addf %73, %72 : vector<5x32xf32>
      %c0_40 = arith.constant 0 : index
      %c0_41 = arith.constant 0 : index
      %75 = vector.load %arg4[%c0_40, %c0_41] : memref<5x32xf32, #tpu.memory_space<vmem>>, vector<5x32xf32>
      tpu.vector_store %arg4[%c0_40, %c0_41], %74 {strides = array<i32>} : memref<5x32xf32, #tpu.memory_space<vmem>>, vector<5x32xf32>,
      %76 = vector.extract_strided_slice %74 {offsets = [0, 0], sizes = [1, 32], strides = [1, 1]} : vector<5x32xf32> to vector<1x32xf32>
      %77 = vector.extract_strided_slice %74 {offsets = [1, 0], sizes = [1, 32], strides = [1, 1]} : vector<5x32xf32> to vector<1x32xf32>
      %78 = vector.extract_strided_slice %74 {offsets = [2, 0], sizes = [1, 32], strides = [1, 1]} : vector<5x32xf32> to vector<1x32xf32>
      %79 = vector.extract_strided_slice %74 {offsets = [3, 0], sizes = [1, 32], strides = [1, 1]} : vector<5x32xf32> to vector<1x32xf32>
      %80 = vector.extract_strided_slice %74 {offsets = [4, 0], sizes = [1, 32], strides = [1, 1]} : vector<5x32xf32> to vector<1x32xf32>
      %81 = arith.divf %77, %76 : vector<1x32xf32>
      %82 = arith.mulf %76, %81 : vector<1x32xf32>
      %83 = arith.mulf %82, %81 : vector<1x32xf32>
      %84 = arith.subf %78, %83 : vector<1x32xf32>
      %cst_42 = arith.constant 2.000000e+00 : f32
      %85 = vector.broadcast %cst_42 : f32 to vector<1x32xf32>
      %86 = arith.mulf %85, %79 : vector<1x32xf32>
      %87 = arith.subf %80, %86 : vector<1x32xf32>
      %88 = arith.addf %87, %78 : vector<1x32xf32>
      %89 = arith.divf %88, %84 : vector<1x32xf32>
      %cst_43 = arith.constant 1.000000e+00 : f32
      %90 = vector.broadcast %cst_43 : f32 to vector<1x32xf32>
      %91 = arith.subf %90, %89 : vector<1x32xf32>
      %c0_44 = arith.constant 0 : index
      %c0_45 = arith.constant 0 : index
      %92 = vector.load %arg5[%c0_44, %c0_45] : memref<1x32xf32, #tpu.memory_space<vmem>>, vector<1x32xf32>
      tpu.vector_store %arg5[%c0_44, %c0_45], %91 {strides = array<i32>} : memref<1x32xf32, #tpu.memory_space<vmem>>, vector<1x32xf32>,
    } else {
    }
    return
  }
  func.func @transform_0(%arg0: i32) -> (i32, i32) {
    %c0_i32 = arith.constant 0 : i32
    %c0_i32_0 = arith.constant 0 : i32
    return %arg0, %c0_i32 : i32, i32
  }
  func.func @transform_1(%arg0: i32) -> (i32, i32) {
    %c0_i32 = arith.constant 0 : i32
    %c0_i32_0 = arith.constant 0 : i32
    return %arg0, %c0_i32 : i32, i32
  }
  func.func @transform_2(%arg0: i32) -> (i32, i32) {
    %c0_i32 = arith.constant 0 : i32
    %c0_i32_0 = arith.constant 0 : i32
    %c0_i32_1 = arith.constant 0 : i32
    return %c0_i32, %c0_i32_0 : i32, i32
  }
  func.func @transform_3(%arg0: i32) -> (i32, i32) {
    %c0_i32 = arith.constant 0 : i32
    %c0_i32_0 = arith.constant 0 : i32
    %c0_i32_1 = arith.constant 0 : i32
    return %c0_i32, %c0_i32_0 : i32, i32
  }
  func.func @transform_4(%arg0: i32) -> (i32, i32) {
    %c0_i32 = arith.constant 0 : i32
    %c0_i32_0 = arith.constant 0 : i32
    %c0_i32_1 = arith.constant 0 : i32
    return %c0_i32, %c0_i32_0 : i32, i32
  }
}

</mosaic_0001>

<llo_original>
// kernel: tpu_custom_call.1
$region0: #{tpu_custom_call.1}
  #allocation0 [shape = 'u32[]', space=smem, size = 0x4, offset = 0x4, fixed_abs, tag = 'smem constant byte address 0x4 - core index']
  #allocation1 [shape = 'u32[72,128]{1,0:T(1,128)}', space=vmem, size = 0x9000, scoped, tag = 'internal scratch']
  #allocation2 [shape = 'f32[1,128]{1,0:T(1,128)}', space=vmem, size = 0x200, scoped, tag = 'scratch operand']
  #allocation3 [shape = 'f32[1,128]{1,0:T(1,128)}', space=vmem, size = 0x200, scoped, tag = 'scratch operand']
  #allocation4 [shape = 'f32[1,128]{1,0:T(1,128)}', space=vmem, size = 0x200, scoped, tag = 'scratch operand']
  #allocation5 [shape = 'f32[1,128]{1,0:T(1,128)}', space=vmem, size = 0x200, scoped, tag = 'scratch operand']
  %s0 = inlined_call_operand.vmem [shape: f32[2,128], index: 0, kind: input, shape index: {}]
  %s1 = inlined_call_operand.vmem [shape: f32[2,128], index: 1, kind: input, shape index: {}]
  %s2 = inlined_call_operand.hbm [shape: f32[5,32], index: 2, kind: input, shape index: {}, may-alias: {2,3}]
  %s3 = inlined_call_operand.hbm [shape: f32[5,32], index: 3, kind: output, shape index: {0}, may-alias: {2,3}]
  %s4 = inlined_call_operand.hbm [shape: f32[1,32], index: 4, kind: output, shape index: {1}]
  %5 = xla_tuple %s3, %s4
  %s6 = sld [smem:[#allocation0]]
  $region42: #{tpu_custom_call.1} parent=0
    _
  %s8 = ssub.s32 1, %s6
  %s9 = scalar_select 0, %s8, %s6
  $region1: #{tpu_custom_call.1} parent=0
    #allocation6 [shape = 'u8[4096]{0}', space=vmem, size = 0x1000, scoped, tag = 'input window, operand 2, single buffered']
    #allocation7 [shape = 's32[1]{0}', space=sflag, size = 0x4, scoped, tag = 'scoped memory for tpu_custom_call.1']
    #allocation8 [shape = 's32[1]{0}', space=sflag, size = 0x4, scoped, tag = 'scoped memory for tpu_custom_call.1']
    #allocation9 [shape = 'u8[4096]{0}', space=vmem, size = 0x1000, scoped, tag = 'output window, operand 0, single buffered']
    #allocation10 [shape = 'u8[512]{0}', space=vmem, size = 0x400, scoped, tag = 'output window, operand 1, single buffered']
    #allocation11 [shape = 's32[1]{0}', space=sflag, size = 0x4, scoped, tag = 'scoped memory for tpu_custom_call.1']
    %10 = vsyncpa [#allocation7], 0
    %11 = vsyncpa [#allocation8], 0
    %12 = vsyncpa [#allocation11], 0
    // Predicated region
    $region2: #{tpu_custom_call.1} parent=1 // pred_check
      _
    $region3: #{tpu_custom_call.1} parent=1 // pred_check_branch
      %14 = sbr.rel (0) target = $region5
    $region4: #{tpu_custom_call.1} parent=1 // pred_region
      _
    $region5: #{tpu_custom_call.1} parent=1 // pred_fallthru
      _
    // Predicated region
    $region6: #{tpu_custom_call.1} parent=1 // pred_check
      _
    $region7: #{tpu_custom_call.1} parent=1 // pred_check_branch
      %16 = sbr.rel (0) target = $region9
    $region8: #{tpu_custom_call.1} parent=1 // pred_region
      _
    $region9: #{tpu_custom_call.1} parent=1 // pred_fallthru
      _
    // Predicated region
    $region10: #{tpu_custom_call.1} parent=1 // pred_check
      _
    $region11: #{tpu_custom_call.1} parent=1 // pred_check_branch
      %18 = sbr.rel (0) target = $region13
    $region12: #{tpu_custom_call.1} parent=1 // pred_region
      %20 = vsyncadd [#allocation7], 0
      %s22 = sshll.u32 %s2, 4
      %s23 = int_to_ptr.hbm [resolvable:$true] %s22
      %s24 = sshll.u32 [#allocation6], 4
      %s25 = int_to_ptr.vmem [resolvable:$true] %s24
      %27 = dma.hbm_to_vmem [thread:$0]  %s23, 128, %s25, [#allocation7]
    $region13: #{tpu_custom_call.1} parent=1 // pred_fallthru
      _
    // Predicated region
    $region14: #{tpu_custom_call.1} parent=1 // pred_check
      _
    $region15: #{tpu_custom_call.1} parent=1 // pred_check_branch
      %29 = sbr.rel (0) target = $region17
    $region16: #{tpu_custom_call.1} parent=1 // pred_region
      %31 = dma.done [#allocation7], 128
    $region17: #{tpu_custom_call.1} parent=1 // pred_fallthru
      _
    %p32 = scmp.eq.s32.totalorder 0, 0
    // Predicated region
    $region18: #{tpu_custom_call.1} parent=1 // pred_check
      %p33 = pneg %p32
    $region19: #{tpu_custom_call.1} parent=1 // pred_check_branch
      %35 = sbr.rel (%p33) target = $region21
    $region20: #{tpu_custom_call.1} parent=1 // pred_region
      %36 = vst [vmem:[#allocation2] sm:$0x1] 0.0
      %37 = vst [vmem:[#allocation3] sm:$0x1] 0.0
      %38 = vst [vmem:[#allocation4] sm:$0x1] 0.0
      %39 = vst [vmem:[#allocation5] sm:$0x1] 0.0
    $region21: #{tpu_custom_call.1} parent=1 // pred_fallthru
      _
    %v40 = vld [vmem:[%s0] sm:$0x3]
    %v41 = vld [vmem:[%s1] sm:$0x3]
    %v42 = vld [vmem:[#allocation2] sm:$0x1]
    %vm43 = vcmask 1041408
    %v44 = vsel %vm43, %v40, 0.0
    %v45 = vrot.slane %v44, 4
    %v46 = vadd.f32 %v44, %v45
    %v47 = vrot.slane %v46, 2
    %v48 = vadd.f32 %v46, %v47
    %v49 = vrot.slane %v48, 1
    %v50 = vadd.f32 %v48, %v49
    %v51 = vadd.f32 %v42, %v50
    %52 = vst [vmem:[#allocation2] sm:$0x1] %v51
    %v53 = vld [vmem:[#allocation3] sm:$0x1]
    %v54 = vmul.f32 %v40, %v40
    %v55 = vsel %vm43, %v54, 0.0
    %v56 = vrot.slane %v55, 4
    %v57 = vadd.f32 %v55, %v56
    %v58 = vrot.slane %v57, 2
    %v59 = vadd.f32 %v57, %v58
    %v60 = vrot.slane %v59, 1
    %v61 = vadd.f32 %v59, %v60
    %v62 = vadd.f32 %v53, %v61
    %63 = vst [vmem:[#allocation3] sm:$0x1] %v62
    %v64 = vld [vmem:[#allocation4] sm:$0x1]
    %v65 = vmul.f32 %v40, %v41
    %v66 = vsel %vm43, %v65, 0.0
    %v67 = vrot.slane %v66, 4
    %v68 = vadd.f32 %v66, %v67
    %v69 = vrot.slane %v68, 2
    %v70 = vadd.f32 %v68, %v69
    %v71 = vrot.slane %v70, 1
    %v72 = vadd.f32 %v70, %v71
    %v73 = vadd.f32 %v64, %v72
    %74 = vst [vmem:[#allocation4] sm:$0x1] %v73
    %v75 = vld [vmem:[#allocation5] sm:$0x1]
    %v76 = vmul.f32 %v41, %v41
    %v77 = vsel %vm43, %v76, 0.0
    %v78 = vrot.slane %v77, 4
    %v79 = vadd.f32 %v77, %v78
    %v80 = vrot.slane %v79, 2
    %v81 = vadd.f32 %v79, %v80
    %v82 = vrot.slane %v81, 1
    %v83 = vadd.f32 %v81, %v82
    %v84 = vadd.f32 %v75, %v83
    %85 = vst [vmem:[#allocation5] sm:$0x1] %v84
    // Predicated region
    $region22: #{tpu_custom_call.1} parent=1 // pred_check
      %p86 = pneg %p32
    $region23: #{tpu_custom_call.1} parent=1 // pred_check_branch
      %88 = sbr.rel (%p86) target = $region25
    $region24: #{tpu_custom_call.1} parent=1 // pred_region
      %v89 = vld [vmem:[#allocation2] sm:$0x1]
      %v90 = vadd.f32 %v89, 0.0
      %92 = vrot.lane.b32.xlu0 %v90, 96
      %v93 = vpop.permute.xlu0 %92
      %v95 = vadd.f32 %v90, %v93
      %96 = vrot.lane.b32.xlu0 %v90, 64
      %v97 = vpop.permute.xlu0 %96
      %v99 = vadd.f32 %v95, %v97
      %100 = vrot.lane.b32.xlu0 %v90, 32
      %v101 = vpop.permute.xlu0 %100
      %v103 = vadd.f32 %v99, %v101
      %v104 = vld [vmem:[#allocation3] sm:$0x1]
      %v105 = vadd.f32 %v104, 0.0
      %107 = vrot.lane.b32.xlu0 %v105, 96
      %v108 = vpop.permute.xlu0 %107
      %v110 = vadd.f32 %v105, %v108
      %111 = vrot.lane.b32.xlu0 %v105, 64
      %v112 = vpop.permute.xlu0 %111
      %v114 = vadd.f32 %v110, %v112
      %115 = vrot.lane.b32.xlu0 %v105, 32
      %v116 = vpop.permute.xlu0 %115
      %v118 = vadd.f32 %v114, %v116
      %v119 = vld [vmem:[#allocation4] sm:$0x1]
      %v120 = vadd.f32 %v119, 0.0
      %122 = vrot.lane.b32.xlu0 %v120, 96
      %v123 = vpop.permute.xlu0 %122
      %v125 = vadd.f32 %v120, %v123
      %126 = vrot.lane.b32.xlu0 %v120, 64
      %v127 = vpop.permute.xlu0 %126
      %v129 = vadd.f32 %v125, %v127
      %130 = vrot.lane.b32.xlu0 %v120, 32
      %v131 = vpop.permute.xlu0 %130
      %v133 = vadd.f32 %v129, %v131
      %v134 = vld [vmem:[#allocation5] sm:$0x1]
      %v135 = vadd.f32 %v134, 0.0
      %137 = vrot.lane.b32.xlu0 %v135, 96
      %v138 = vpop.permute.xlu0 %137
      %v140 = vadd.f32 %v135, %v138
      %141 = vrot.lane.b32.xlu0 %v135, 64
      %v142 = vpop.permute.xlu0 %141
      %v144 = vadd.f32 %v140, %v142
      %145 = vrot.lane.b32.xlu0 %v135, 32
      %v146 = vpop.permute.xlu0 %145
      %v148 = vadd.f32 %v144, %v146
      %v150 = vperm.slane %v103, 0
      %v153 = vperm.slane %v118, 0
      %v156 = vperm.slane %v133, 0
      %v159 = vperm.slane %v148, 0
      %vm161 = vcmask 1040384
      %v162 = vsel %vm161, 8.0, %v150
      %v163 = vsel %vm43, %v162, %v153
      %vm164 = vcmask 1042432
      %v165 = vsel %vm164, %v163, %v156
      %vm166 = vcmask 1043456
      %v167 = vsel %vm166, %v165, %v159
      %v168 = vld [vmem:[#allocation6] sm:$0x1f]
      %v169 = vadd.f32 %v168, %v167
      %vm170 = vcmask 258048
      %171 = vst.msk [vmem:[#allocation9] sm:$0x1f] %vm170, %v169
      %v173 = vrot.slane %v169, 7
      %v175 = vrcp.pop %v173
      %v176 = vmul.f32 %v173, %v175
      %v177 = vsub.f32 1.0, %v176
      %v178 = vmul.f32 %v175, %v177
      %v179 = vadd.f32 %v175, %v178
      %vm180 = vweird.f32 %v173
      %vm181 = vweird.f32 %v175
      %vm182 = vmor %vm180, %vm181
      %v183 = vsel %vm182, %v175, %v179
      %v184 = vand.u32 2147483647, %v173
      %vm185 = vcmp.eq.f32.partialorder %v184, 8.507059e+37
      %v186 = vand.u32 %v173, 2147483648
      %v187 = vor.u32 1.1754944e-38, %v186
      %v188 = vsel %vm185, %v187, %v183
      %v189 = vmul.f32 %v169, %v188
      %v191 = vrot.slane %v189, 1
      %v193 = vmul.f32 %v169, %v191
      %v194 = vmul.f32 %v193, %v191
      %v196 = vrot.slane %v194, 6
      %v198 = vsub.f32 %v169, %v196
      %v199 = vmul.f32 %v169, 2.0
      %v201 = vrot.slane %v199, 7
      %v203 = vsub.f32 %v169, %v201
      %v204 = vrot.slane %v169, 6
      %v206 = vadd.f32 %v203, %v204
      %v208 = vrot.slane %v198, 6
      %v210 = vrcp.pop %v208
      %v211 = vmul.f32 %v208, %v210
      %v212 = vsub.f32 1.0, %v211
      %v213 = vmul.f32 %v210, %v212
      %v214 = vadd.f32 %v210, %v213
      %vm215 = vweird.f32 %v208
      %vm216 = vweird.f32 %v210
      %vm217 = vmor %vm215, %vm216
      %v218 = vsel %vm217, %v210, %v214
      %v219 = vand.u32 2147483647, %v208
      %vm220 = vcmp.eq.f32.partialorder %v219, 8.507059e+37
      %v221 = vand.u32 %v208, 2147483648
      %v222 = vor.u32 1.1754944e-38, %v221
      %v223 = vsel %vm220, %v222, %v218
      %v224 = vmul.f32 %v206, %v223
      %v225 = vsub.f32 1.0, %v224
      %vm226 = vcmask 258052
      %227 = vst.msk [vmem:[#allocation10 - $0x4] sm:$0x10] %vm226, %v225
    $region25: #{tpu_custom_call.1} parent=1 // pred_fallthru
      _
    // Predicated region
    $region26: #{tpu_custom_call.1} parent=1 // pred_check
      _
    $region27: #{tpu_custom_call.1} parent=1 // pred_check_branch
      %229 = sbr.rel (0) target = $region29
    $region28: #{tpu_custom_call.1} parent=1 // pred_region
      %231 = vsyncadd [#allocation8], 0
      %s233 = sshll.u32 [#allocation9], 4
      %s234 = int_to_ptr.vmem [resolvable:$true] %s233
      %s235 = sshll.u32 %s3, 4
      %s236 = int_to_ptr.hbm [resolvable:$true] %s235
      %238 = dma.vmem_to_hbm [thread:$0]  %s234, 128, %s236, [#allocation8]
    $region29: #{tpu_custom_call.1} parent=1 // pred_fallthru
      _
    // Predicated region
    $region30: #{tpu_custom_call.1} parent=1 // pred_check
      _
    $region31: #{tpu_custom_call.1} parent=1 // pred_check_branch
      %240 = sbr.rel (0) target = $region33
    $region32: #{tpu_custom_call.1} parent=1 // pred_region
      %242 = vsyncadd [#allocation11], 0
      %s244 = sshll.u32 [#allocation10], 4
      %s245 = int_to_ptr.vmem [resolvable:$true] %s244
      %s246 = sshll.u32 %s4, 4
      %s247 = int_to_ptr.hbm [resolvable:$true] %s246
      %249 = dma.vmem_to_hbm [thread:$0]  %s245, 16, %s247, [#allocation11]
    $region33: #{tpu_custom_call.1} parent=1 // pred_fallthru
      _
    // Predicated region
    $region34: #{tpu_custom_call.1} parent=1 // pred_check
      _
    $region35: #{tpu_custom_call.1} parent=1 // pred_check_branch
      %251 = sbr.rel (0) target = $region37
    $region36: #{tpu_custom_call.1} parent=1 // pred_region
      %253 = dma.done [#allocation8], 128
    $region37: #{tpu_custom_call.1} parent=1 // pred_fallthru
      _
    // Predicated region
    $region38: #{tpu_custom_call.1} parent=1 // pred_check
      _
    $region39: #{tpu_custom_call.1} parent=1 // pred_check_branch
      %255 = sbr.rel (0) target = $region41
    $region40: #{tpu_custom_call.1} parent=1 // pred_region
      %257 = dma.done [#allocation11], 16
    $region41: #{tpu_custom_call.1} parent=1 // pred_fallthru
      _
    %258 = vsyncpa [#allocation7], 1
    %259 = vsyncpa [#allocation8], 1
    %260 = vsyncpa [#allocation11], 1

</llo_original>
